<compile_context>
chip_gen: v5e
topology: v5e:2x2
jax: 0.10.0
libtpu: 0.0.40
codegen_flags: <defaults>
</compile_context>

<pallas_src>
import math
from functools import partial

import jax
import jax.numpy as jnp
from jax import lax
from jax.experimental import pallas as pl
from jax.experimental.pallas import tpu as pltpu


def _mhsa_kernel(x_ref, wqkv_ref, bqkv_ref, wo_ref, bo_ref, mask_ref, o_ref, *,
                 heads, d_k, d_model):
    # x_ref: (rows, D) activation slab, rows = batches_per_step * seq, with
    # q = k = v (true self-attention in MGL2Rank -> single activation DMA).
    # wqkv_ref: (D, 3D) fused projection; columns [0:D]=Q, [D:2D]=K, [2D:3D]=V.
    x = x_ref[...]
    qkv = jnp.dot(x, wqkv_ref[...],
                  preferred_element_type=jnp.float32) + bqkv_ref[...]

    scale = 1.0 / math.sqrt(d_k)
    # Contract the last dims of q and k directly (q @ k^T) — no transpose.
    qkT_dims = (((1,), (1,)), ((), ()))
    # Additive block-diagonal batch mask (0 within a batch, -1e30 across
    # batches): lets every batch share one score matmul per head.
    mask = mask_ref[...]

    ctx_tiles = []
    for h in range(heads):                      # short, fully unrolled
        c0 = h * d_k                            # static lane slice per head
        q_h = qkv[:, c0:c0 + d_k]                               # (rows, d_k)
        k_h = qkv[:, d_model + c0:d_model + c0 + d_k]
        v_h = qkv[:, 2 * d_model + c0:2 * d_model + c0 + d_k]

        s = lax.dot_general(q_h, k_h, qkT_dims,
                            preferred_element_type=jnp.float32) * scale
        s = s + mask                            # cross-batch scores -> -inf
        s_max = jnp.max(s, axis=-1, keepdims=True)
        p = jnp.exp(s - s_max)                  # masked entries underflow to 0
        denom = jnp.sum(p, axis=-1, keepdims=True)
        attn = p / denom                        # exact division (parity)
        ctx_tiles.append(jnp.dot(attn, v_h,
                                 preferred_element_type=jnp.float32))

    # Keep per-head contexts in vregs; one lane-axis concat instead of masked
    # partial stores into a VMEM scratch followed by a full reload.
    ctx = jnp.concatenate(ctx_tiles, axis=-1)                   # (rows, D)
    out = jnp.dot(ctx, wo_ref[...],
                  preferred_element_type=jnp.float32) + bo_ref[...]
    o_ref[...] = out.astype(o_ref.dtype)


def _default_batch_grid(batch, seq):
    """Split across v7x's 2 TensorCores only when each core gets enough rows
    (>= 512, 16-row aligned) to amortize the duplicated weight DMA and the
    ~0.35 us per-step overhead.  Otherwise run a single collapsed grid step."""
    if batch % 2 != 0:
        return 1
    rows_per_core = (batch // 2) * seq
    if rows_per_core < 512 or rows_per_core % 16 != 0:
        return 1
    try:
        kind = jax.devices()[0].device_kind.lower()
    except Exception:
        return 1
    return 2 if ("v7" in kind or "7x" in kind) else 1


def multi_self_attention(x, params, *, heads, batch_grid=None):
    """x: (B, S, D) float32 activations (self-attention: q = k = v = x)."""
    B, S, D = x.shape
    assert D % heads == 0
    d_k = D // heads

    if batch_grid is None:
        batch_grid = _default_batch_grid(B, S)
    if B % batch_grid != 0:
        batch_grid = 1
    bpg = B // batch_grid          # batches handled per grid step
    rows = bpg * S

    # Fuse Q/K/V projections: one (D, 3D) weight, one (1, 3D) bias.
    wqkv = jnp.concatenate([params["wq"], params["wk"], params["wv"]], axis=1)
    bqkv = jnp.concatenate(
        [params["bq"], params["bk"], params["bv"]]).reshape(1, 3 * D)
    wo = params["wo"]
    bo = params["bo"].reshape(1, D)

    x2d = x.reshape(B * S, D)      # flatten batch rows for the projections

    # Block-diagonal additive mask: all bpg batches in a grid step share one
    # (rows, rows) score matmul per head; cross-batch blocks get -1e30, the
    # softmax sends those probabilities to exactly 0, so attn @ v matches the
    # per-batch reference bit-for-bit up to f32 rounding.
    batch_id = jnp.arange(rows, dtype=jnp.int32) // S
    same = batch_id[:, None] == batch_id[None, :]
    mask = jnp.where(same, 0.0, -1e30).astype(jnp.float32)

    kernel = partial(_mhsa_kernel, heads=heads, d_k=d_k, d_model=D)

    out2d = pl.pallas_call(
        kernel,
        out_shape=jax.ShapeDtypeStruct((B * S, D), x.dtype),
        grid_spec=pltpu.PrefetchScalarGridSpec(
            num_scalar_prefetch=0,
            grid=(batch_grid,),
            in_specs=[
                pl.BlockSpec((rows, D), lambda i: (i, 0)),      # activations
                pl.BlockSpec((D, 3 * D), lambda i: (0, 0)),     # fused Wqkv
                pl.BlockSpec((1, 3 * D), lambda i: (0, 0)),     # fused bqkv
                pl.BlockSpec((D, D), lambda i: (0, 0)),         # Wo
                pl.BlockSpec((1, D), lambda i: (0, 0)),         # bo
                pl.BlockSpec((rows, rows), lambda i: (0, 0)),   # batch mask
            ],
            out_specs=pl.BlockSpec((rows, D), lambda i: (i, 0)),
        ),
        compiler_params=pltpu.CompilerParams(
            dimension_semantics=("parallel",)),
    )(x2d, wqkv, bqkv, wo, bo, mask)

    return out2d.reshape(B, S, D)


def _reference(x, params, *, heads):
    """Plain-JAX reference mirroring the PyTorch forward (eval mode, q=k=v)."""
    B, S, D = x.shape
    d_k = D // heads

    def lin(t, w, b):
        return t @ w + b

    def split(t):
        return t.reshape(B, S, heads, d_k).transpose(0, 2, 1, 3)

    qh = split(lin(x, params["wq"], params["bq"]))
    kh = split(lin(x, params["wk"], params["bk"]))
    vh = split(lin(x, params["wv"], params["bv"]))
    scores = jnp.einsum('bhqd,bhkd->bhqk', qh, kh) / math.sqrt(d_k)
    attn = jax.nn.softmax(scores, axis=-1)
    ctx = jnp.einsum('bhqk,bhkd->bhqd', attn, vh)
    concat = ctx.transpose(0, 2, 1, 3).reshape(B, S, D)
    return lin(concat, params["wo"], params["bo"])


if __name__ == "__main__":
    # Small, module-consistent shapes.
    B, S, D, H = 2, 8, 32, 4
    key = jax.random.PRNGKey(0)
    ks = jax.random.split(key, 12)

    # torch Linear weight is (out, in); we store the transposed (in, out) form
    # so the kernel computes x @ W + b.
    def init_w(k):
        bound = 1.0 / math.sqrt(D)
        return jax.random.uniform(k, (D, D), jnp.float32, -bound, bound)

    def init_b(k):
        bound = 1.0 / math.sqrt(D)
        return jax.random.uniform(k, (D,), jnp.float32, -bound, bound)

    params = {
        "wq": init_w(ks[0]), "bq": init_b(ks[1]),
        "wk": init_w(ks[2]), "bk": init_b(ks[3]),
        "wv": init_w(ks[4]), "bv": init_b(ks[5]),
        "wo": init_w(ks[6]), "bo": init_b(ks[7]),
    }

    x = jax.random.normal(ks[8], (B, S, D), jnp.float32)

    out = multi_self_attention(x, params, heads=H)
    out = jax.block_until_ready(out)

    ref = _reference(x, params, heads=H)
    assert out.shape == (B, S, D)
    assert jnp.allclose(out, ref, atol=1e-3, rtol=1e-3), "mismatch vs reference"

    print("KERNEL_OK")
</pallas_src>

<mosaic_0001>
module attributes {stable_mosaic.version = 11 : i64} {
  func.func @_mhsa_kernel(%arg0: i32, %arg1: memref<16x32xf32, #tpu.memory_space<vmem>>, %arg2: memref<32x96xf32, #tpu.memory_space<vmem>>, %arg3: memref<1x96xf32, #tpu.memory_space<vmem>>, %arg4: memref<32x32xf32, #tpu.memory_space<vmem>>, %arg5: memref<1x32xf32, #tpu.memory_space<vmem>>, %arg6: memref<16x16xf32, #tpu.memory_space<vmem>>, %arg7: memref<16x32xf32, #tpu.memory_space<vmem>>) attributes {dimension_semantics = [#tpu.dimension_semantics<parallel>], iteration_bounds = array<i64: 1>, scalar_prefetch = 0 : i64, scratch_operands = 0 : i64, tpu.core_type = #tpu.core_type<tc>, window_params = [{transform_indices = @transform_0, window_bounds = array<i64: 16, 32>}, {pipeline_mode = #tpu.pipeline_mode<synchronous>, transform_indices = @transform_1, window_bounds = array<i64: 32, 96>}, {pipeline_mode = #tpu.pipeline_mode<synchronous>, transform_indices = @transform_2, window_bounds = array<i64: 1, 96>}, {pipeline_mode = #tpu.pipeline_mode<synchronous>, transform_indices = @transform_3, window_bounds = array<i64: 32, 32>}, {pipeline_mode = #tpu.pipeline_mode<synchronous>, transform_indices = @transform_4, window_bounds = array<i64: 1, 32>}, {pipeline_mode = #tpu.pipeline_mode<synchronous>, transform_indices = @transform_5, window_bounds = array<i64: 16, 16>}, {transform_indices = @transform_6, window_bounds = array<i64: 16, 32>}]} {
    %c0 = arith.constant 0 : index
    %c0_0 = arith.constant 0 : index
    %0 = vector.load %arg1[%c0, %c0_0] : memref<16x32xf32, #tpu.memory_space<vmem>>, vector<16x32xf32>
    %c0_1 = arith.constant 0 : index
    %c0_2 = arith.constant 0 : index
    %1 = vector.load %arg2[%c0_1, %c0_2] : memref<32x96xf32, #tpu.memory_space<vmem>>, vector<32x96xf32>
    %cst = arith.constant dense<0.000000e+00> : vector<16x96xf32>
    %2 = tpu.matmul %0, %1, %cst {dimension_numbers = #tpu.dot_dimension_numbers<[1], [0], [0], [1], [0, 0, 1, 1], [], []>} : vector<16x32xf32>, vector<32x96xf32>, vector<16x96xf32> -> vector<16x96xf32>
    %c0_3 = arith.constant 0 : index
    %c0_4 = arith.constant 0 : index
    %3 = vector.load %arg3[%c0_3, %c0_4] : memref<1x96xf32, #tpu.memory_space<vmem>>, vector<1x96xf32>
    %4 = vector.broadcast %3 : vector<1x96xf32> to vector<16x96xf32>
    %5 = arith.addf %2, %4 : vector<16x96xf32>
    %c0_5 = arith.constant 0 : index
    %c0_6 = arith.constant 0 : index
    %6 = vector.load %arg6[%c0_5, %c0_6] : memref<16x16xf32, #tpu.memory_space<vmem>>, vector<16x16xf32>
    %7 = vector.extract_strided_slice %5 {offsets = [0, 0], sizes = [16, 8], strides = [1, 1]} : vector<16x96xf32> to vector<16x8xf32>
    %8 = vector.extract_strided_slice %5 {offsets = [0, 32], sizes = [16, 8], strides = [1, 1]} : vector<16x96xf32> to vector<16x8xf32>
    %9 = vector.extract_strided_slice %5 {offsets = [0, 64], sizes = [16, 8], strides = [1, 1]} : vector<16x96xf32> to vector<16x8xf32>
    %cst_7 = arith.constant dense<0.000000e+00> : vector<16x16xf32>
    %10 = tpu.matmul %7, %8, %cst_7 {dimension_numbers = #tpu.dot_dimension_numbers<[1], [1], [0], [0], [0, 0, 1, 0], [], []>} : vector<16x8xf32>, vector<16x8xf32>, vector<16x16xf32> -> vector<16x16xf32>
    %cst_8 = arith.constant 0.353553385 : f32
    %11 = vector.broadcast %cst_8 : f32 to vector<16x16xf32>
    %12 = arith.mulf %10, %11 : vector<16x16xf32>
    %13 = arith.addf %12, %6 : vector<16x16xf32>
    %cst_9 = arith.constant dense<0xFF800000> : vector<16xf32>
    %14 = vector.multi_reduction <maximumf>, %13, %cst_9 [1] : vector<16x16xf32> to vector<16xf32>
    %15 = vector.shape_cast %14 : vector<16xf32> to vector<16x1xf32>
    %16 = vector.broadcast %15 : vector<16x1xf32> to vector<16x16xf32>
    %17 = arith.subf %13, %16 : vector<16x16xf32>
    %18 = math.exp %17 : vector<16x16xf32>
    %cst_10 = arith.constant dense<0.000000e+00> : vector<16xf32>
    %19 = vector.multi_reduction <add>, %18, %cst_10 [1] : vector<16x16xf32> to vector<16xf32>
    %20 = vector.shape_cast %19 : vector<16xf32> to vector<16x1xf32>
    %21 = vector.broadcast %20 : vector<16x1xf32> to vector<16x16xf32>
    %22 = arith.divf %18, %21 : vector<16x16xf32>
    %cst_11 = arith.constant dense<0.000000e+00> : vector<16x8xf32>
    %23 = tpu.matmul %22, %9, %cst_11 {dimension_numbers = #tpu.dot_dimension_numbers<[1], [0], [0], [1], [0, 0, 1, 1], [], []>} : vector<16x16xf32>, vector<16x8xf32>, vector<16x8xf32> -> vector<16x8xf32>
    %24 = vector.extract_strided_slice %5 {offsets = [0, 8], sizes = [16, 8], strides = [1, 1]} : vector<16x96xf32> to vector<16x8xf32>
    %25 = vector.extract_strided_slice %5 {offsets = [0, 40], sizes = [16, 8], strides = [1, 1]} : vector<16x96xf32> to vector<16x8xf32>
    %26 = vector.extract_strided_slice %5 {offsets = [0, 72], sizes = [16, 8], strides = [1, 1]} : vector<16x96xf32> to vector<16x8xf32>
    %cst_12 = arith.constant dense<0.000000e+00> : vector<16x16xf32>
    %27 = tpu.matmul %24, %25, %cst_12 {dimension_numbers = #tpu.dot_dimension_numbers<[1], [1], [0], [0], [0, 0, 1, 0], [], []>} : vector<16x8xf32>, vector<16x8xf32>, vector<16x16xf32> -> vector<16x16xf32>
    %cst_13 = arith.constant 0.353553385 : f32
    %28 = vector.broadcast %cst_13 : f32 to vector<16x16xf32>
    %29 = arith.mulf %27, %28 : vector<16x16xf32>
    %30 = arith.addf %29, %6 : vector<16x16xf32>
    %cst_14 = arith.constant dense<0xFF800000> : vector<16xf32>
    %31 = vector.multi_reduction <maximumf>, %30, %cst_14 [1] : vector<16x16xf32> to vector<16xf32>
    %32 = vector.shape_cast %31 : vector<16xf32> to vector<16x1xf32>
    %33 = vector.broadcast %32 : vector<16x1xf32> to vector<16x16xf32>
    %34 = arith.subf %30, %33 : vector<16x16xf32>
    %35 = math.exp %34 : vector<16x16xf32>
    %cst_15 = arith.constant dense<0.000000e+00> : vector<16xf32>
    %36 = vector.multi_reduction <add>, %35, %cst_15 [1] : vector<16x16xf32> to vector<16xf32>
    %37 = vector.shape_cast %36 : vector<16xf32> to vector<16x1xf32>
    %38 = vector.broadcast %37 : vector<16x1xf32> to vector<16x16xf32>
    %39 = arith.divf %35, %38 : vector<16x16xf32>
    %cst_16 = arith.constant dense<0.000000e+00> : vector<16x8xf32>
    %40 = tpu.matmul %39, %26, %cst_16 {dimension_numbers = #tpu.dot_dimension_numbers<[1], [0], [0], [1], [0, 0, 1, 1], [], []>} : vector<16x16xf32>, vector<16x8xf32>, vector<16x8xf32> -> vector<16x8xf32>
    %41 = vector.extract_strided_slice %5 {offsets = [0, 16], sizes = [16, 8], strides = [1, 1]} : vector<16x96xf32> to vector<16x8xf32>
    %42 = vector.extract_strided_slice %5 {offsets = [0, 48], sizes = [16, 8], strides = [1, 1]} : vector<16x96xf32> to vector<16x8xf32>
    %43 = vector.extract_strided_slice %5 {offsets = [0, 80], sizes = [16, 8], strides = [1, 1]} : vector<16x96xf32> to vector<16x8xf32>
    %cst_17 = arith.constant dense<0.000000e+00> : vector<16x16xf32>
    %44 = tpu.matmul %41, %42, %cst_17 {dimension_numbers = #tpu.dot_dimension_numbers<[1], [1], [0], [0], [0, 0, 1, 0], [], []>} : vector<16x8xf32>, vector<16x8xf32>, vector<16x16xf32> -> vector<16x16xf32>
    %cst_18 = arith.constant 0.353553385 : f32
    %45 = vector.broadcast %cst_18 : f32 to vector<16x16xf32>
    %46 = arith.mulf %44, %45 : vector<16x16xf32>
    %47 = arith.addf %46, %6 : vector<16x16xf32>
    %cst_19 = arith.constant dense<0xFF800000> : vector<16xf32>
    %48 = vector.multi_reduction <maximumf>, %47, %cst_19 [1] : vector<16x16xf32> to vector<16xf32>
    %49 = vector.shape_cast %48 : vector<16xf32> to vector<16x1xf32>
    %50 = vector.broadcast %49 : vector<16x1xf32> to vector<16x16xf32>
    %51 = arith.subf %47, %50 : vector<16x16xf32>
    %52 = math.exp %51 : vector<16x16xf32>
    %cst_20 = arith.constant dense<0.000000e+00> : vector<16xf32>
    %53 = vector.multi_reduction <add>, %52, %cst_20 [1] : vector<16x16xf32> to vector<16xf32>
    %54 = vector.shape_cast %53 : vector<16xf32> to vector<16x1xf32>
    %55 = vector.broadcast %54 : vector<16x1xf32> to vector<16x16xf32>
    %56 = arith.divf %52, %55 : vector<16x16xf32>
    %cst_21 = arith.constant dense<0.000000e+00> : vector<16x8xf32>
    %57 = tpu.matmul %56, %43, %cst_21 {dimension_numbers = #tpu.dot_dimension_numbers<[1], [0], [0], [1], [0, 0, 1, 1], [], []>} : vector<16x16xf32>, vector<16x8xf32>, vector<16x8xf32> -> vector<16x8xf32>
    %58 = vector.extract_strided_slice %5 {offsets = [0, 24], sizes = [16, 8], strides = [1, 1]} : vector<16x96xf32> to vector<16x8xf32>
    %59 = vector.extract_strided_slice %5 {offsets = [0, 56], sizes = [16, 8], strides = [1, 1]} : vector<16x96xf32> to vector<16x8xf32>
    %60 = vector.extract_strided_slice %5 {offsets = [0, 88], sizes = [16, 8], strides = [1, 1]} : vector<16x96xf32> to vector<16x8xf32>
    %cst_22 = arith.constant dense<0.000000e+00> : vector<16x16xf32>
    %61 = tpu.matmul %58, %59, %cst_22 {dimension_numbers = #tpu.dot_dimension_numbers<[1], [1], [0], [0], [0, 0, 1, 0], [], []>} : vector<16x8xf32>, vector<16x8xf32>, vector<16x16xf32> -> vector<16x16xf32>
    %cst_23 = arith.constant 0.353553385 : f32
    %62 = vector.broadcast %cst_23 : f32 to vector<16x16xf32>
    %63 = arith.mulf %61, %62 : vector<16x16xf32>
    %64 = arith.addf %63, %6 : vector<16x16xf32>
    %cst_24 = arith.constant dense<0xFF800000> : vector<16xf32>
    %65 = vector.multi_reduction <maximumf>, %64, %cst_24 [1] : vector<16x16xf32> to vector<16xf32>
    %66 = vector.shape_cast %65 : vector<16xf32> to vector<16x1xf32>
    %67 = vector.broadcast %66 : vector<16x1xf32> to vector<16x16xf32>
    %68 = arith.subf %64, %67 : vector<16x16xf32>
    %69 = math.exp %68 : vector<16x16xf32>
    %cst_25 = arith.constant dense<0.000000e+00> : vector<16xf32>
    %70 = vector.multi_reduction <add>, %69, %cst_25 [1] : vector<16x16xf32> to vector<16xf32>
    %71 = vector.shape_cast %70 : vector<16xf32> to vector<16x1xf32>
    %72 = vector.broadcast %71 : vector<16x1xf32> to vector<16x16xf32>
    %73 = arith.divf %69, %72 : vector<16x16xf32>
    %cst_26 = arith.constant dense<0.000000e+00> : vector<16x8xf32>
    %74 = tpu.matmul %73, %60, %cst_26 {dimension_numbers = #tpu.dot_dimension_numbers<[1], [0], [0], [1], [0, 0, 1, 1], [], []>} : vector<16x16xf32>, vector<16x8xf32>, vector<16x8xf32> -> vector<16x8xf32>
    %75 = tpu.concatenate %23, %40, %57, %74 in 1 : vector<16x8xf32>, vector<16x8xf32>, vector<16x8xf32>, vector<16x8xf32> -> vector<16x32xf32>
    %c0_27 = arith.constant 0 : index
    %c0_28 = arith.constant 0 : index
    %76 = vector.load %arg4[%c0_27, %c0_28] : memref<32x32xf32, #tpu.memory_space<vmem>>, vector<32x32xf32>
    %cst_29 = arith.constant dense<0.000000e+00> : vector<16x32xf32>
    %77 = tpu.matmul %75, %76, %cst_29 {dimension_numbers = #tpu.dot_dimension_numbers<[1], [0], [0], [1], [0, 0, 1, 1], [], []>} : vector<16x32xf32>, vector<32x32xf32>, vector<16x32xf32> -> vector<16x32xf32>
    %c0_30 = arith.constant 0 : index
    %c0_31 = arith.constant 0 : index
    %78 = vector.load %arg5[%c0_30, %c0_31] : memref<1x32xf32, #tpu.memory_space<vmem>>, vector<1x32xf32>
    %79 = vector.broadcast %78 : vector<1x32xf32> to vector<16x32xf32>
    %80 = arith.addf %77, %79 : vector<16x32xf32>
    %c0_32 = arith.constant 0 : index
    %c0_33 = arith.constant 0 : index
    %81 = vector.load %arg7[%c0_32, %c0_33] : memref<16x32xf32, #tpu.memory_space<vmem>>, vector<16x32xf32>
    tpu.vector_store %arg7[%c0_32, %c0_33], %80 {strides = array<i32>} : memref<16x32xf32, #tpu.memory_space<vmem>>, vector<16x32xf32>,
    return
  }
  func.func @transform_0(%arg0: i32) -> (i32, i32) {
    %c0_i32 = arith.constant 0 : i32
    %c0_i32_0 = arith.constant 0 : i32
    return %arg0, %c0_i32 : i32, i32
  }
  func.func @transform_1(%arg0: i32) -> (i32, i32) {
    %c0_i32 = arith.constant 0 : i32
    %c0_i32_0 = arith.constant 0 : i32
    %c0_i32_1 = arith.constant 0 : i32
    return %c0_i32, %c0_i32_0 : i32, i32
  }
  func.func @transform_2(%arg0: i32) -> (i32, i32) {
    %c0_i32 = arith.constant 0 : i32
    %c0_i32_0 = arith.constant 0 : i32
    %c0_i32_1 = arith.constant 0 : i32
    return %c0_i32, %c0_i32_0 : i32, i32
  }
  func.func @transform_3(%arg0: i32) -> (i32, i32) {
    %c0_i32 = arith.constant 0 : i32
    %c0_i32_0 = arith.constant 0 : i32
    %c0_i32_1 = arith.constant 0 : i32
    return %c0_i32, %c0_i32_0 : i32, i32
  }
  func.func @transform_4(%arg0: i32) -> (i32, i32) {
    %c0_i32 = arith.constant 0 : i32
    %c0_i32_0 = arith.constant 0 : i32
    %c0_i32_1 = arith.constant 0 : i32
    return %c0_i32, %c0_i32_0 : i32, i32
  }
  func.func @transform_5(%arg0: i32) -> (i32, i32) {
    %c0_i32 = arith.constant 0 : i32
    %c0_i32_0 = arith.constant 0 : i32
    %c0_i32_1 = arith.constant 0 : i32
    return %c0_i32, %c0_i32_0 : i32, i32
  }
  func.func @transform_6(%arg0: i32) -> (i32, i32) {
    %c0_i32 = arith.constant 0 : i32
    %c0_i32_0 = arith.constant 0 : i32
    return %arg0, %c0_i32 : i32, i32
  }
}

</mosaic_0001>

<llo_original>
// kernel: tpu_custom_call.1
$region0: #{tpu_custom_call.1}
  #allocation0 [shape = 'u32[]', space=smem, size = 0x4, offset = 0x4, fixed_abs, tag = 'smem constant byte address 0x4 - core index']
  #allocation1 [shape = 'u32[72,128]{1,0:T(1,128)}', space=vmem, size = 0x9000, scoped, tag = 'internal scratch']
  %s0 = inlined_call_operand.hbm [shape: f32[16,32], index: 0, kind: input, shape index: {}]
  %s1 = inlined_call_operand.hbm [shape: f32[32,96], index: 1, kind: input, shape index: {}]
  %s2 = inlined_call_operand.vmem [shape: f32[1,96], index: 2, kind: input, shape index: {}]
  %s3 = inlined_call_operand.hbm [shape: f32[32,32], index: 3, kind: input, shape index: {}]
  %s4 = inlined_call_operand.vmem [shape: f32[1,32], index: 4, kind: input, shape index: {}]
  %s5 = inlined_call_operand.hbm [shape: f32[16,16], index: 5, kind: input, shape index: {}]
  %s6 = inlined_call_operand.hbm [shape: f32[16,32], index: 6, kind: output, shape index: {}]
  %s7 = sld [smem:[#allocation0]]
  $region50: #{tpu_custom_call.1} parent=0
    _
  %s9 = ssub.s32 1, %s7
  %s10 = scalar_select 0, %s9, %s7
  $region1: #{tpu_custom_call.1} parent=0
    #allocation2 [shape = 'u8[8192]{0}', space=vmem, size = 0x2000, scoped, tag = 'input window, operand 0, single buffered']
    #allocation3 [shape = 's32[1]{0}', space=sflag, size = 0x4, scoped, tag = 'scoped memory for tpu_custom_call.1']
    #allocation4 [shape = 's32[1]{0}', space=sflag, size = 0x4, scoped, tag = 'scoped memory for tpu_custom_call.1']
    #allocation5 [shape = 'u8[16384]{0}', space=vmem, size = 0x4000, scoped, tag = 'input window, operand 1, single buffered']
    #allocation6 [shape = 's32[1]{0}', space=sflag, size = 0x4, scoped, tag = 'scoped memory for tpu_custom_call.1']
    #allocation7 [shape = 'u8[16384]{0}', space=vmem, size = 0x4000, scoped, tag = 'input window, operand 3, single buffered']
    #allocation8 [shape = 'u8[8192]{0}', space=vmem, size = 0x2000, scoped, tag = 'input window, operand 5, single buffered']
    #allocation9 [shape = 's32[1]{0}', space=sflag, size = 0x4, scoped, tag = 'scoped memory for tpu_custom_call.1']
    #allocation10 [shape = 'u8[8192]{0}', space=vmem, size = 0x2000, scoped, tag = 'output window, operand 0, single buffered']
    %11 = vsyncpa [#allocation3], 0
    %12 = vsyncpa [#allocation6], 0
    %13 = vsyncpa [#allocation9], 0
    %14 = vsyncpa [#allocation4], 0
    // Predicated region
    $region2: #{tpu_custom_call.1} parent=1 // pred_check
      _
    $region3: #{tpu_custom_call.1} parent=1 // pred_check_branch
      %16 = sbr.rel (0) target = $region5
    $region4: #{tpu_custom_call.1} parent=1 // pred_region
      %18 = vsyncadd [#allocation3], 0
      %s19 = sshll.u32 %s0, 4
      %s20 = int_to_ptr.hbm [resolvable:$true] %s19
      %s21 = sshll.u32 [#allocation2], 4
      %s22 = int_to_ptr.vmem [resolvable:$true] %s21
      %27 = dma.hbm_to_vmem [thread:$0]  %s20, 256, %s22, [#allocation3], 128, 128, 8
    $region5: #{tpu_custom_call.1} parent=1 // pred_fallthru
      _
    // Predicated region
    $region6: #{tpu_custom_call.1} parent=1 // pred_check
      _
    $region7: #{tpu_custom_call.1} parent=1 // pred_check_branch
      %29 = sbr.rel (0) target = $region9
    $region8: #{tpu_custom_call.1} parent=1 // pred_region
      %31 = vsyncadd [#allocation6], 0
      %s32 = sshll.u32 %s1, 4
      %s33 = int_to_ptr.hbm [resolvable:$true] %s32
      %s34 = sshll.u32 [#allocation5], 4
      %s35 = int_to_ptr.vmem [resolvable:$true] %s34
      %40 = dma.hbm_to_vmem [thread:$0]  %s33, 512, %s35, [#allocation6], 128, 128, 8
    $region9: #{tpu_custom_call.1} parent=1 // pred_fallthru
      _
    // Predicated region
    $region10: #{tpu_custom_call.1} parent=1 // pred_check
      _
    $region11: #{tpu_custom_call.1} parent=1 // pred_check_branch
      %42 = sbr.rel (0) target = $region13
    $region12: #{tpu_custom_call.1} parent=1 // pred_region
      _
    $region13: #{tpu_custom_call.1} parent=1 // pred_fallthru
      _
    // Predicated region
    $region14: #{tpu_custom_call.1} parent=1 // pred_check
      _
    $region15: #{tpu_custom_call.1} parent=1 // pred_check_branch
      %44 = sbr.rel (0) target = $region17
    $region16: #{tpu_custom_call.1} parent=1 // pred_region
      %46 = vsyncadd [#allocation6], 0
      %s47 = sshll.u32 %s3, 4
      %s48 = int_to_ptr.hbm [resolvable:$true] %s47
      %s49 = sshll.u32 [#allocation7], 4
      %s50 = int_to_ptr.vmem [resolvable:$true] %s49
      %55 = dma.hbm_to_vmem [thread:$0]  %s48, 512, %s50, [#allocation6], 128, 128, 8
    $region17: #{tpu_custom_call.1} parent=1 // pred_fallthru
      _
    // Predicated region
    $region18: #{tpu_custom_call.1} parent=1 // pred_check
      _
    $region19: #{tpu_custom_call.1} parent=1 // pred_check_branch
      %57 = sbr.rel (0) target = $region21
    $region20: #{tpu_custom_call.1} parent=1 // pred_region
      _
    $region21: #{tpu_custom_call.1} parent=1 // pred_fallthru
      _
    // Predicated region
    $region22: #{tpu_custom_call.1} parent=1 // pred_check
      _
    $region23: #{tpu_custom_call.1} parent=1 // pred_check_branch
      %59 = sbr.rel (0) target = $region25
    $region24: #{tpu_custom_call.1} parent=1 // pred_region
      %61 = vsyncadd [#allocation9], 0
      %s62 = sshll.u32 %s5, 4
      %s63 = int_to_ptr.hbm [resolvable:$true] %s62
      %s64 = sshll.u32 [#allocation8], 4
      %s65 = int_to_ptr.vmem [resolvable:$true] %s64
      %70 = dma.hbm_to_vmem [thread:$0]  %s63, 256, %s65, [#allocation9], 128, 128, 8
    $region25: #{tpu_custom_call.1} parent=1 // pred_fallthru
      _
    // Predicated region
    $region26: #{tpu_custom_call.1} parent=1 // pred_check
      _
    $region27: #{tpu_custom_call.1} parent=1 // pred_check_branch
      %72 = sbr.rel (0) target = $region29
    $region28: #{tpu_custom_call.1} parent=1 // pred_region
      %74 = dma.done [#allocation3], 256
    $region29: #{tpu_custom_call.1} parent=1 // pred_fallthru
      _
    // Predicated region
    $region30: #{tpu_custom_call.1} parent=1 // pred_check
      _
    $region31: #{tpu_custom_call.1} parent=1 // pred_check_branch
      %76 = sbr.rel (0) target = $region33
    $region32: #{tpu_custom_call.1} parent=1 // pred_region
      %78 = dma.done [#allocation6], 512
    $region33: #{tpu_custom_call.1} parent=1 // pred_fallthru
      _
    // Predicated region
    $region34: #{tpu_custom_call.1} parent=1 // pred_check
      _
    $region35: #{tpu_custom_call.1} parent=1 // pred_check_branch
      %80 = sbr.rel (0) target = $region37
    $region36: #{tpu_custom_call.1} parent=1 // pred_region
      %82 = dma.done [#allocation6], 512
    $region37: #{tpu_custom_call.1} parent=1 // pred_fallthru
      _
    // Predicated region
    $region38: #{tpu_custom_call.1} parent=1 // pred_check
      _
    $region39: #{tpu_custom_call.1} parent=1 // pred_check_branch
      %84 = sbr.rel (0) target = $region41
    $region40: #{tpu_custom_call.1} parent=1 // pred_region
      %86 = dma.done [#allocation9], 256
    $region41: #{tpu_custom_call.1} parent=1 // pred_fallthru
      _
    %v87 = vld [vmem:[#allocation2] sm:$0xff]
    %v88 = vld [vmem:[#allocation2 + $0x8] sm:$0xff]
    %v89 = vld [vmem:[#allocation5] sm:$0xff]
    %v90 = vld [vmem:[#allocation5 + $0x8] sm:$0xff]
    %v91 = vld [vmem:[#allocation5 + $0x10] sm:$0xff]
    %v92 = vld [vmem:[#allocation5 + $0x18] sm:$0xff]
    %v93 = vld [vmem:[%s2] sm:$0x1]
    %v95 = vperm.slane %v93, 0
    %vm97 = vcmask 261120
    %v99 = vsel %vm97, %v87, 0
    %v102 = vsel %vm97, %v88, 0
    %104 = vmatpush.msra.mxu0 0.0
    %105 = vmatpush.msra.mxu0 0.0
    %106 = vmatpush.msra.mxu0 0.0
    %107 = vmatpush.msra.mxu0 0.0
    %108 = vmatpush.msra.mxu0 0.0
    %109 = vmatpush.msra.mxu0 0.0
    %110 = vmatpush.msra.mxu0 0.0
    %111 = vmatpush.msra.mxu0 0.0
    %112 = vmatpush.msra.mxu0 0.0
    %113 = vmatpush.msra.mxu0 0.0
    %114 = vmatpush.msra.mxu0 0.0
    %115 = vmatpush.msra.mxu0 0.0
    %116 = vmatpush.msra.mxu0 %v92
    %117 = vmatpush.msra.mxu0 %v91
    %118 = vmatpush.msra.mxu0 %v90
    %119 = vmatpush.msra.mxu0 %v89
    %120 = vmatmul.f32.gmra.mxu0 %v99
    %v121 = vpop.f32.mrf.mxu0
    %v122 = vadd.f32 %v95, %v121
    %123 = vmatmul.f32.gmra.mxu0 %v102
    %v124 = vpop.f32.mrf.mxu0
    %v125 = vadd.f32 %v95, %v124
    %126 = vdwg.mxu0
    %v127 = vld [vmem:[#allocation8] sm:$0xff]
    %v128 = vld [vmem:[#allocation8 + $0x8] sm:$0xff]
    %131 = vrot.lane.b32.xlu0 %v122, 96
    %v132 = vpop.permute.xlu0 %131
    %133 = vrot.lane.b32.xlu0 %v125, 96
    %v134 = vpop.permute.xlu0 %133
    %vm135 = vcmask 64512
    %v136 = vsel %vm135, %v122, 0
    %v138 = vsel %vm135, %v125, 0
    %v140 = vsel %vm135, %v132, 0
    %v142 = vsel %vm135, %v134, 0
    %144 = vmatpush.xpose.msra.mxu0 0.0
    %145 = vmatpush.xpose.msra.mxu0 0.0
    %146 = vmatpush.xpose.msra.mxu0 0.0
    %147 = vmatpush.xpose.msra.mxu0 0.0
    %148 = vmatpush.xpose.msra.mxu0 0.0
    %149 = vmatpush.xpose.msra.mxu0 0.0
    %150 = vmatpush.xpose.msra.mxu0 0.0
    %151 = vmatpush.xpose.msra.mxu0 0.0
    %152 = vmatpush.xpose.msra.mxu0 0.0
    %153 = vmatpush.xpose.msra.mxu0 0.0
    %154 = vmatpush.xpose.msra.mxu0 0.0
    %155 = vmatpush.xpose.msra.mxu0 0.0
    %156 = vmatpush.xpose.msra.mxu0 0.0
    %157 = vmatpush.xpose.msra.mxu0 0.0
    %158 = vmatpush.xpose.msra.mxu0 %v142
    %159 = vmatpush.xpose.msra.mxu0 %v140
    %160 = vmatmul.f32.gmra.mxu0 %v136
    %v161 = vpop.f32.mrf.mxu0
    %v162 = vadd.f32 0.0, %v161
    %163 = vmatmul.f32.gmra.mxu0 %v138
    %v164 = vpop.f32.mrf.mxu0
    %v165 = vadd.f32 0.0, %v164
    %166 = vdwg.mxu0
    %v167 = vmul.f32 %v162, 0.35355338
    %v168 = vmul.f32 %v165, 0.35355338
    %v169 = vadd.f32 %v167, %v127
    %v170 = vadd.f32 %v168, %v128
    %vm171 = vcmask 130048
    %v172 = vsel %vm171, %v169, -inf
    %173 = vmax.xlane.f32.xlu0 %v172
    %v174 = vpop.xlane.xlu0 %173
    %v175 = vsel %vm171, %v170, -inf
    %176 = vmax.xlane.f32.xlu0 %v175
    %v177 = vpop.xlane.xlu0 %176
    %v178 = vsub.f32 %v169, %v174
    %v179 = vsub.f32 %v170, %v177
    %v180 = vmul.f32 %v178, 1.442695
    %v181 = vpow.pop %v180
    %v182 = vmul.f32 %v179, 1.442695
    %v183 = vpow.pop %v182
    %v184 = vsel %vm171, %v181, 0.0
    %185 = vadd.xlane.f32.xlu0 %v184
    %v186 = vpop.xlane.xlu0 %185
    %v187 = vsel %vm171, %v183, 0.0
    %188 = vadd.xlane.f32.xlu0 %v187
    %v189 = vpop.xlane.xlu0 %188
    %v190 = vrcp.pop %v186
    %v191 = vmul.f32 %v186, %v190
    %v192 = vsub.f32 1.0, %v191
    %v193 = vmul.f32 %v190, %v192
    %v194 = vadd.f32 %v190, %v193
    %vm195 = vweird.f32 %v186
    %vm196 = vweird.f32 %v190
    %vm197 = vmor %vm195, %vm196
    %v198 = vsel %vm197, %v190, %v194
    %v199 = vand.u32 2147483647, %v186
    %vm200 = vcmp.eq.f32.partialorder %v199, 8.507059e+37
    %v201 = vand.u32 %v186, 2147483648
    %v202 = vor.u32 1.1754944e-38, %v201
    %v203 = vsel %vm200, %v202, %v198
    %v204 = vmul.f32 %v181, %v203
    %v205 = vrcp.pop %v189
    %v206 = vmul.f32 %v189, %v205
    %v207 = vsub.f32 1.0, %v206
    %v208 = vmul.f32 %v205, %v207
    %v209 = vadd.f32 %v205, %v208
    %vm210 = vweird.f32 %v189
    %vm211 = vweird.f32 %v205
    %vm212 = vmor %vm210, %vm211
    %v213 = vsel %vm212, %v205, %v209
    %v214 = vand.u32 2147483647, %v189
    %vm215 = vcmp.eq.f32.partialorder %v214, 8.507059e+37
    %v216 = vand.u32 %v189, 2147483648
    %v217 = vor.u32 1.1754944e-38, %v216
    %v218 = vsel %vm215, %v217, %v213
    %v219 = vmul.f32 %v183, %v218
    %220 = vrot.lane.b32.xlu0 %v122, 64
    %v221 = vpop.permute.xlu0 %220
    %222 = vrot.lane.b32.xlu0 %v125, 64
    %v223 = vpop.permute.xlu0 %222
    %v227 = vsel %vm171, %v204, 0
    %v230 = vsel %vm171, %v219, 0
    %232 = vmatpush.msra.mxu0 0.0
    %233 = vmatpush.msra.mxu0 0.0
    %234 = vmatpush.msra.mxu0 0.0
    %235 = vmatpush.msra.mxu0 0.0
    %236 = vmatpush.msra.mxu0 0.0
    %237 = vmatpush.msra.mxu0 0.0
    %238 = vmatpush.msra.mxu0 0.0
    %239 = vmatpush.msra.mxu0 0.0
    %240 = vmatpush.msra.mxu0 0.0
    %241 = vmatpush.msra.mxu0 0.0
    %242 = vmatpush.msra.mxu0 0.0
    %243 = vmatpush.msra.mxu0 0.0
    %244 = vmatpush.msra.mxu0 0.0
    %245 = vmatpush.msra.mxu0 0.0
    %246 = vmatpush.msra.mxu0 %v223
    %247 = vmatpush.msra.mxu0 %v221
    %248 = vmatmul.f32.gmra.mxu0 %v227
    %v249 = vpop.f32.mrf.mxu0
    %v250 = vadd.f32 0.0, %v249
    %251 = vmatmul.f32.gmra.mxu0 %v230
    %v252 = vpop.f32.mrf.mxu0
    %v253 = vadd.f32 0.0, %v252
    %254 = vdwg.mxu0
    %255 = vrot.lane.b32.xlu0 %v122, 120
    %v256 = vpop.permute.xlu0 %255
    %257 = vrot.lane.b32.xlu0 %v125, 120
    %v258 = vpop.permute.xlu0 %257
    %259 = vrot.lane.b32.xlu0 %v122, 88
    %v260 = vpop.permute.xlu0 %259
    %261 = vrot.lane.b32.xlu0 %v125, 88
    %v262 = vpop.permute.xlu0 %261
    %v263 = vsel %vm135, %v256, 0
    %v265 = vsel %vm135, %v258, 0
    %v267 = vsel %vm135, %v260, 0
    %v269 = vsel %vm135, %v262, 0
    %271 = vmatpush.xpose.msra.mxu0 0.0
    %272 = vmatpush.xpose.msra.mxu0 0.0
    %273 = vmatpush.xpose.msra.mxu0 0.0
    %274 = vmatpush.xpose.msra.mxu0 0.0
    %275 = vmatpush.xpose.msra.mxu0 0.0
    %276 = vmatpush.xpose.msra.mxu0 0.0
    %277 = vmatpush.xpose.msra.mxu0 0.0
    %278 = vmatpush.xpose.msra.mxu0 0.0
    %279 = vmatpush.xpose.msra.mxu0 0.0
    %280 = vmatpush.xpose.msra.mxu0 0.0
    %281 = vmatpush.xpose.msra.mxu0 0.0
    %282 = vmatpush.xpose.msra.mxu0 0.0
    %283 = vmatpush.xpose.msra.mxu0 0.0
    %284 = vmatpush.xpose.msra.mxu0 0.0
    %285 = vmatpush.xpose.msra.mxu0 %v269
    %286 = vmatpush.xpose.msra.mxu0 %v267
    %287 = vmatmul.f32.gmra.mxu0 %v263
    %v288 = vpop.f32.mrf.mxu0
    %v289 = vadd.f32 0.0, %v288
    %290 = vmatmul.f32.gmra.mxu0 %v265
    %v291 = vpop.f32.mrf.mxu0
    %v292 = vadd.f32 0.0, %v291
    %293 = vdwg.mxu0
    %v294 = vmul.f32 %v289, 0.35355338
    %v295 = vmul.f32 %v292, 0.35355338
    %v296 = vadd.f32 %v294, %v127
    %v297 = vadd.f32 %v295, %v128
    %v298 = vsel %vm171, %v296, -inf
    %299 = vmax.xlane.f32.xlu0 %v298
    %v300 = vpop.xlane.xlu0 %299
    %v301 = vsel %vm171, %v297, -inf
    %302 = vmax.xlane.f32.xlu0 %v301
    %v303 = vpop.xlane.xlu0 %302
    %v304 = vsub.f32 %v296, %v300
    %v305 = vsub.f32 %v297, %v303
    %v306 = vmul.f32 %v304, 1.442695
    %v307 = vpow.pop %v306
    %v308 = vmul.f32 %v305, 1.442695
    %v309 = vpow.pop %v308
    %v310 = vsel %vm171, %v307, 0.0
    %311 = vadd.xlane.f32.xlu0 %v310
    %v312 = vpop.xlane.xlu0 %311
    %v313 = vsel %vm171, %v309, 0.0
    %314 = vadd.xlane.f32.xlu0 %v313
    %v315 = vpop.xlane.xlu0 %314
    %v316 = vrcp.pop %v312
    %v317 = vmul.f32 %v312, %v316
    %v318 = vsub.f32 1.0, %v317
    %v319 = vmul.f32 %v316, %v318
    %v320 = vadd.f32 %v316, %v319
    %vm321 = vweird.f32 %v312
    %vm322 = vweird.f32 %v316
    %vm323 = vmor %vm321, %vm322
    %v324 = vsel %vm323, %v316, %v320
    %v325 = vand.u32 2147483647, %v312
    %vm326 = vcmp.eq.f32.partialorder %v325, 8.507059e+37
    %v327 = vand.u32 %v312, 2147483648
    %v328 = vor.u32 1.1754944e-38, %v327
    %v329 = vsel %vm326, %v328, %v324
    %v330 = vmul.f32 %v307, %v329
    %v331 = vrcp.pop %v315
    %v332 = vmul.f32 %v315, %v331
    %v333 = vsub.f32 1.0, %v332
    %v334 = vmul.f32 %v331, %v333
    %v335 = vadd.f32 %v331, %v334
    %vm336 = vweird.f32 %v315
    %vm337 = vweird.f32 %v331
    %vm338 = vmor %vm336, %vm337
    %v339 = vsel %vm338, %v331, %v335
    %v340 = vand.u32 2147483647, %v315
    %vm341 = vcmp.eq.f32.partialorder %v340, 8.507059e+37
    %v342 = vand.u32 %v315, 2147483648
    %v343 = vor.u32 1.1754944e-38, %v342
    %v344 = vsel %vm341, %v343, %v339
    %v345 = vmul.f32 %v309, %v344
    %346 = vrot.lane.b32.xlu0 %v122, 56
    %v347 = vpop.permute.xlu0 %346
    %348 = vrot.lane.b32.xlu0 %v125, 56
    %v349 = vpop.permute.xlu0 %348
    %v353 = vsel %vm171, %v330, 0
    %v356 = vsel %vm171, %v345, 0
    %358 = vmatpush.msra.mxu0 0.0
    %359 = vmatpush.msra.mxu0 0.0
    %360 = vmatpush.msra.mxu0 0.0
    %361 = vmatpush.msra.mxu0 0.0
    %362 = vmatpush.msra.mxu0 0.0
    %363 = vmatpush.msra.mxu0 0.0
    %364 = vmatpush.msra.mxu0 0.0
    %365 = vmatpush.msra.mxu0 0.0
    %366 = vmatpush.msra.mxu0 0.0
    %367 = vmatpush.msra.mxu0 0.0
    %368 = vmatpush.msra.mxu0 0.0
    %369 = vmatpush.msra.mxu0 0.0
    %370 = vmatpush.msra.mxu0 0.0
    %371 = vmatpush.msra.mxu0 0.0
    %372 = vmatpush.msra.mxu0 %v349
    %373 = vmatpush.msra.mxu0 %v347
    %374 = vmatmul.f32.gmra.mxu0 %v353
    %v375 = vpop.f32.mrf.mxu0
    %v376 = vadd.f32 0.0, %v375
    %377 = vmatmul.f32.gmra.mxu0 %v356
    %v378 = vpop.f32.mrf.mxu0
    %v379 = vadd.f32 0.0, %v378
    %380 = vdwg.mxu0
    %381 = vrot.lane.b32.xlu0 %v122, 112
    %v382 = vpop.permute.xlu0 %381
    %383 = vrot.lane.b32.xlu0 %v125, 112
    %v384 = vpop.permute.xlu0 %383
    %385 = vrot.lane.b32.xlu0 %v122, 80
    %v386 = vpop.permute.xlu0 %385
    %387 = vrot.lane.b32.xlu0 %v125, 80
    %v388 = vpop.permute.xlu0 %387
    %v389 = vsel %vm135, %v382, 0
    %v391 = vsel %vm135, %v384, 0
    %v393 = vsel %vm135, %v386, 0
    %v395 = vsel %vm135, %v388, 0
    %397 = vmatpush.xpose.msra.mxu0 0.0
    %398 = vmatpush.xpose.msra.mxu0 0.0
    %399 = vmatpush.xpose.msra.mxu0 0.0
    %400 = vmatpush.xpose.msra.mxu0 0.0
    %401 = vmatpush.xpose.msra.mxu0 0.0
    %402 = vmatpush.xpose.msra.mxu0 0.0
    %403 = vmatpush.xpose.msra.mxu0 0.0
    %404 = vmatpush.xpose.msra.mxu0 0.0
    %405 = vmatpush.xpose.msra.mxu0 0.0
    %406 = vmatpush.xpose.msra.mxu0 0.0
    %407 = vmatpush.xpose.msra.mxu0 0.0
    %408 = vmatpush.xpose.msra.mxu0 0.0
    %409 = vmatpush.xpose.msra.mxu0 0.0
    %410 = vmatpush.xpose.msra.mxu0 0.0
    %411 = vmatpush.xpose.msra.mxu0 %v395
    %412 = vmatpush.xpose.msra.mxu0 %v393
    %413 = vmatmul.f32.gmra.mxu0 %v389
    %v414 = vpop.f32.mrf.mxu0
    %v415 = vadd.f32 0.0, %v414
    %416 = vmatmul.f32.gmra.mxu0 %v391
    %v417 = vpop.f32.mrf.mxu0
    %v418 = vadd.f32 0.0, %v417
    %419 = vdwg.mxu0
    %v420 = vmul.f32 %v415, 0.35355338
    %v421 = vmul.f32 %v418, 0.35355338
    %v422 = vadd.f32 %v420, %v127
    %v423 = vadd.f32 %v421, %v128
    %v424 = vsel %vm171, %v422, -inf
    %425 = vmax.xlane.f32.xlu0 %v424
    %v426 = vpop.xlane.xlu0 %425
    %v427 = vsel %vm171, %v423, -inf
    %428 = vmax.xlane.f32.xlu0 %v427
    %v429 = vpop.xlane.xlu0 %428
    %v430 = vsub.f32 %v422, %v426
    %v431 = vsub.f32 %v423, %v429
    %v432 = vmul.f32 %v430, 1.442695
    %v433 = vpow.pop %v432
    %v434 = vmul.f32 %v431, 1.442695
    %v435 = vpow.pop %v434
    %v436 = vsel %vm171, %v433, 0.0
    %437 = vadd.xlane.f32.xlu0 %v436
    %v438 = vpop.xlane.xlu0 %437
    %v439 = vsel %vm171, %v435, 0.0
    %440 = vadd.xlane.f32.xlu0 %v439
    %v441 = vpop.xlane.xlu0 %440
    %v442 = vrcp.pop %v438
    %v443 = vmul.f32 %v438, %v442
    %v444 = vsub.f32 1.0, %v443
    %v445 = vmul.f32 %v442, %v444
    %v446 = vadd.f32 %v442, %v445
    %vm447 = vweird.f32 %v438
    %vm448 = vweird.f32 %v442
    %vm449 = vmor %vm447, %vm448
    %v450 = vsel %vm449, %v442, %v446
    %v451 = vand.u32 2147483647, %v438
    %vm452 = vcmp.eq.f32.partialorder %v451, 8.507059e+37
    %v453 = vand.u32 %v438, 2147483648
    %v454 = vor.u32 1.1754944e-38, %v453
    %v455 = vsel %vm452, %v454, %v450
    %v456 = vmul.f32 %v433, %v455
    %v457 = vrcp.pop %v441
    %v458 = vmul.f32 %v441, %v457
    %v459 = vsub.f32 1.0, %v458
    %v460 = vmul.f32 %v457, %v459
    %v461 = vadd.f32 %v457, %v460
    %vm462 = vweird.f32 %v441
    %vm463 = vweird.f32 %v457
    %vm464 = vmor %vm462, %vm463
    %v465 = vsel %vm464, %v457, %v461
    %v466 = vand.u32 2147483647, %v441
    %vm467 = vcmp.eq.f32.partialorder %v466, 8.507059e+37
    %v468 = vand.u32 %v441, 2147483648
    %v469 = vor.u32 1.1754944e-38, %v468
    %v470 = vsel %vm467, %v469, %v465
    %v471 = vmul.f32 %v435, %v470
    %472 = vrot.lane.b32.xlu0 %v122, 48
    %v473 = vpop.permute.xlu0 %472
    %474 = vrot.lane.b32.xlu0 %v125, 48
    %v475 = vpop.permute.xlu0 %474
    %v479 = vsel %vm171, %v456, 0
    %v482 = vsel %vm171, %v471, 0
    %484 = vmatpush.msra.mxu0 0.0
    %485 = vmatpush.msra.mxu0 0.0
    %486 = vmatpush.msra.mxu0 0.0
    %487 = vmatpush.msra.mxu0 0.0
    %488 = vmatpush.msra.mxu0 0.0
    %489 = vmatpush.msra.mxu0 0.0
    %490 = vmatpush.msra.mxu0 0.0
    %491 = vmatpush.msra.mxu0 0.0
    %492 = vmatpush.msra.mxu0 0.0
    %493 = vmatpush.msra.mxu0 0.0
    %494 = vmatpush.msra.mxu0 0.0
    %495 = vmatpush.msra.mxu0 0.0
    %496 = vmatpush.msra.mxu0 0.0
    %497 = vmatpush.msra.mxu0 0.0
    %498 = vmatpush.msra.mxu0 %v475
    %499 = vmatpush.msra.mxu0 %v473
    %500 = vmatmul.f32.gmra.mxu0 %v479
    %v501 = vpop.f32.mrf.mxu0
    %v502 = vadd.f32 0.0, %v501
    %503 = vmatmul.f32.gmra.mxu0 %v482
    %v504 = vpop.f32.mrf.mxu0
    %v505 = vadd.f32 0.0, %v504
    %506 = vdwg.mxu0
    %507 = vrot.lane.b32.xlu0 %v122, 104
    %v508 = vpop.permute.xlu0 %507
    %509 = vrot.lane.b32.xlu0 %v125, 104
    %v510 = vpop.permute.xlu0 %509
    %511 = vrot.lane.b32.xlu0 %v122, 72
    %v512 = vpop.permute.xlu0 %511
    %513 = vrot.lane.b32.xlu0 %v125, 72
    %v514 = vpop.permute.xlu0 %513
    %v515 = vsel %vm135, %v508, 0
    %v517 = vsel %vm135, %v510, 0
    %v519 = vsel %vm135, %v512, 0
    %v521 = vsel %vm135, %v514, 0
    %523 = vmatpush.xpose.msra.mxu0 0.0
    %524 = vmatpush.xpose.msra.mxu0 0.0
    %525 = vmatpush.xpose.msra.mxu0 0.0
    %526 = vmatpush.xpose.msra.mxu0 0.0
    %527 = vmatpush.xpose.msra.mxu0 0.0
    %528 = vmatpush.xpose.msra.mxu0 0.0
    %529 = vmatpush.xpose.msra.mxu0 0.0
    %530 = vmatpush.xpose.msra.mxu0 0.0
    %531 = vmatpush.xpose.msra.mxu0 0.0
    %532 = vmatpush.xpose.msra.mxu0 0.0
    %533 = vmatpush.xpose.msra.mxu0 0.0
    %534 = vmatpush.xpose.msra.mxu0 0.0
    %535 = vmatpush.xpose.msra.mxu0 0.0
    %536 = vmatpush.xpose.msra.mxu0 0.0
    %537 = vmatpush.xpose.msra.mxu0 %v521
    %538 = vmatpush.xpose.msra.mxu0 %v519
    %539 = vmatmul.f32.gmra.mxu0 %v515
    %v540 = vpop.f32.mrf.mxu0
    %v541 = vadd.f32 0.0, %v540
    %542 = vmatmul.f32.gmra.mxu0 %v517
    %v543 = vpop.f32.mrf.mxu0
    %v544 = vadd.f32 0.0, %v543
    %545 = vdwg.mxu0
    %v546 = vmul.f32 %v541, 0.35355338
    %v547 = vmul.f32 %v544, 0.35355338
    %v548 = vadd.f32 %v546, %v127
    %v549 = vadd.f32 %v547, %v128
    %v550 = vsel %vm171, %v548, -inf
    %551 = vmax.xlane.f32.xlu0 %v550
    %v552 = vpop.xlane.xlu0 %551
    %v553 = vsel %vm171, %v549, -inf
    %554 = vmax.xlane.f32.xlu0 %v553
    %v555 = vpop.xlane.xlu0 %554
    %v556 = vsub.f32 %v548, %v552
    %v557 = vsub.f32 %v549, %v555
    %v558 = vmul.f32 %v556, 1.442695
    %v559 = vpow.pop %v558
    %v560 = vmul.f32 %v557, 1.442695
    %v561 = vpow.pop %v560
    %v562 = vsel %vm171, %v559, 0.0
    %563 = vadd.xlane.f32.xlu0 %v562
    %v564 = vpop.xlane.xlu0 %563
    %v565 = vsel %vm171, %v561, 0.0
    %566 = vadd.xlane.f32.xlu0 %v565
    %v567 = vpop.xlane.xlu0 %566
    %v568 = vrcp.pop %v564
    %v569 = vmul.f32 %v564, %v568
    %v570 = vsub.f32 1.0, %v569
    %v571 = vmul.f32 %v568, %v570
    %v572 = vadd.f32 %v568, %v571
    %vm573 = vweird.f32 %v564
    %vm574 = vweird.f32 %v568
    %vm575 = vmor %vm573, %vm574
    %v576 = vsel %vm575, %v568, %v572
    %v577 = vand.u32 2147483647, %v564
    %vm578 = vcmp.eq.f32.partialorder %v577, 8.507059e+37
    %v579 = vand.u32 %v564, 2147483648
    %v580 = vor.u32 1.1754944e-38, %v579
    %v581 = vsel %vm578, %v580, %v576
    %v582 = vmul.f32 %v559, %v581
    %v583 = vrcp.pop %v567
    %v584 = vmul.f32 %v567, %v583
    %v585 = vsub.f32 1.0, %v584
    %v586 = vmul.f32 %v583, %v585
    %v587 = vadd.f32 %v583, %v586
    %vm588 = vweird.f32 %v567
    %vm589 = vweird.f32 %v583
    %vm590 = vmor %vm588, %vm589
    %v591 = vsel %vm590, %v583, %v587
    %v592 = vand.u32 2147483647, %v567
    %vm593 = vcmp.eq.f32.partialorder %v592, 8.507059e+37
    %v594 = vand.u32 %v567, 2147483648
    %v595 = vor.u32 1.1754944e-38, %v594
    %v596 = vsel %vm593, %v595, %v591
    %v597 = vmul.f32 %v561, %v596
    %598 = vrot.lane.b32.xlu0 %v122, 40
    %v599 = vpop.permute.xlu0 %598
    %600 = vrot.lane.b32.xlu0 %v125, 40
    %v601 = vpop.permute.xlu0 %600
    %v605 = vsel %vm171, %v582, 0
    %v608 = vsel %vm171, %v597, 0
    %610 = vmatpush.msra.mxu0 0.0
    %611 = vmatpush.msra.mxu0 0.0
    %612 = vmatpush.msra.mxu0 0.0
    %613 = vmatpush.msra.mxu0 0.0
    %614 = vmatpush.msra.mxu0 0.0
    %615 = vmatpush.msra.mxu0 0.0
    %616 = vmatpush.msra.mxu0 0.0
    %617 = vmatpush.msra.mxu0 0.0
    %618 = vmatpush.msra.mxu0 0.0
    %619 = vmatpush.msra.mxu0 0.0
    %620 = vmatpush.msra.mxu0 0.0
    %621 = vmatpush.msra.mxu0 0.0
    %622 = vmatpush.msra.mxu0 0.0
    %623 = vmatpush.msra.mxu0 0.0
    %624 = vmatpush.msra.mxu0 %v601
    %625 = vmatpush.msra.mxu0 %v599
    %626 = vmatmul.f32.gmra.mxu0 %v605
    %v627 = vpop.f32.mrf.mxu0
    %v628 = vadd.f32 0.0, %v627
    %629 = vmatmul.f32.gmra.mxu0 %v608
    %v630 = vpop.f32.mrf.mxu0
    %v631 = vadd.f32 0.0, %v630
    %632 = vdwg.mxu0
    %635 = vrot.lane.b32.xlu0 %v376, 8
    %v636 = vpop.permute.xlu0 %635
    %637 = vrot.lane.b32.xlu0 %v379, 8
    %v638 = vpop.permute.xlu0 %637
    %643 = vrot.lane.b32.xlu0 %v502, 16
    %v644 = vpop.permute.xlu0 %643
    %645 = vrot.lane.b32.xlu0 %v505, 16
    %v646 = vpop.permute.xlu0 %645
    %651 = vrot.lane.b32.xlu0 %v628, 24
    %v652 = vpop.permute.xlu0 %651
    %653 = vrot.lane.b32.xlu0 %v631, 24
    %v654 = vpop.permute.xlu0 %653
    %v657 = vsel %vm135, %v250, %v636
    %v658 = vsel %vm135, %v253, %v638
    %v659 = vsel %vm171, %v657, %v644
    %v660 = vsel %vm171, %v658, %v646
    %vm661 = vcmask 195584
    %v662 = vsel %vm661, %v659, %v652
    %v663 = vsel %vm661, %v660, %v654
    %v664 = vld [vmem:[#allocation7] sm:$0xff]
    %v665 = vld [vmem:[#allocation7 + $0x8] sm:$0xff]
    %v666 = vld [vmem:[#allocation7 + $0x10] sm:$0xff]
    %v667 = vld [vmem:[#allocation7 + $0x18] sm:$0xff]
    %v668 = vld [vmem:[%s4] sm:$0x1]
    %v670 = vperm.slane %v668, 0
    %v673 = vsel %vm97, %v662, 0
    %v676 = vsel %vm97, %v663, 0
    %678 = vmatpush.msra.mxu0 0.0
    %679 = vmatpush.msra.mxu0 0.0
    %680 = vmatpush.msra.mxu0 0.0
    %681 = vmatpush.msra.mxu0 0.0
    %682 = vmatpush.msra.mxu0 0.0
    %683 = vmatpush.msra.mxu0 0.0
    %684 = vmatpush.msra.mxu0 0.0
    %685 = vmatpush.msra.mxu0 0.0
    %686 = vmatpush.msra.mxu0 0.0
    %687 = vmatpush.msra.mxu0 0.0
    %688 = vmatpush.msra.mxu0 0.0
    %689 = vmatpush.msra.mxu0 0.0
    %690 = vmatpush.msra.mxu0 %v667
    %691 = vmatpush.msra.mxu0 %v666
    %692 = vmatpush.msra.mxu0 %v665
    %693 = vmatpush.msra.mxu0 %v664
    %694 = vmatmul.f32.gmra.mxu0 %v673
    %v695 = vpop.f32.mrf.mxu0
    %v696 = vadd.f32 %v670, %v695
    %697 = vmatmul.f32.gmra.mxu0 %v676
    %v698 = vpop.f32.mrf.mxu0
    %v699 = vadd.f32 %v670, %v698
    %700 = vdwg.mxu0
    %701 = vst.msk [vmem:[#allocation10] sm:$0xff] %vm97, %v696
    %702 = vst.msk [vmem:[#allocation10 + $0x8] sm:$0xff] %vm97, %v699
    // Predicated region
    $region42: #{tpu_custom_call.1} parent=1 // pred_check
      _
    $region43: #{tpu_custom_call.1} parent=1 // pred_check_branch
      %704 = sbr.rel (0) target = $region45
    $region44: #{tpu_custom_call.1} parent=1 // pred_region
      %706 = vsyncadd [#allocation4], 0
      %s707 = sshll.u32 [#allocation10], 4
      %s708 = int_to_ptr.vmem [resolvable:$true] %s707
      %s709 = sshll.u32 %s6, 4
      %s710 = int_to_ptr.hbm [resolvable:$true] %s709
      %715 = dma.vmem_to_hbm [thread:$0]  %s708, 256, %s710, [#allocation4], 128, 128, 8
    $region45: #{tpu_custom_call.1} parent=1 // pred_fallthru
      _
    // Predicated region
    $region46: #{tpu_custom_call.1} parent=1 // pred_check
      _
    $region47: #{tpu_custom_call.1} parent=1 // pred_check_branch
      %717 = sbr.rel (0) target = $region49
    $region48: #{tpu_custom_call.1} parent=1 // pred_region
      %719 = dma.done [#allocation4], 256
    $region49: #{tpu_custom_call.1} parent=1 // pred_fallthru
      _
    %720 = vsyncpa [#allocation3], 1
    %721 = vsyncpa [#allocation6], 1
    %722 = vsyncpa [#allocation9], 1
    %723 = vsyncpa [#allocation4], 1

</llo_original>
